<compile_context>
chip_gen: v5e
topology: v5e:2x2
jax: 0.10.0
libtpu: 0.0.40
codegen_flags: <defaults>
</compile_context>

<pallas_src>
import functools

import numpy as np
import jax
import jax.numpy as jnp
from jax.experimental import pallas as pl
from jax.experimental.pallas import tpu as pltpu


# -----------------------------------------------------------------------------
# Deterministic parameter setup (matches GaussianKernel / update_prior_dist)
# -----------------------------------------------------------------------------
def gaussian_kernel_1d_np(radius, std):
    """1D factor g of the separable 2D Gaussian: w2d[i, j] == g[i] * g[j]
    (exactly the normalized kernel built by GaussianKernel in the reference)."""
    if radius == 0:
        return np.ones((1,), np.float32)
    idx = np.arange(-radius, radius + 1, dtype=np.float64)
    e = np.exp(-(idx * idx) / (2.0 * std * std))
    g = e / e.sum()
    return g.astype(np.float32)


def beta_ppf_np(p, a, b, iters=60):
    """Inverse CDF of Beta(a, b) via bisection on the regularized incomplete
    beta function (replaces scipy.stats.beta.ppf; no scipy dependency).
    Executed eagerly once per batch size and cached by the module."""
    p = jnp.asarray(p, jnp.float32)
    lo = jnp.zeros_like(p)
    hi = jnp.ones_like(p)
    for _ in range(iters):
        mid = 0.5 * (lo + hi)
        go_up = jax.scipy.special.betainc(a, b, mid) < p
        lo = jnp.where(go_up, mid, lo)
        hi = jnp.where(go_up, hi, mid)
    return np.asarray(jax.device_get(hi), np.float32)


# -----------------------------------------------------------------------------
# Pallas kernel: separable depthwise Gaussian conv (VALID) + global spatial max
# -----------------------------------------------------------------------------
def _conv_max_kernel(x_ref, o_ref, *, g, K, Ho, Wo):
    x = x_ref[...]                               # (T, H, W) f32 in VMEM
    # H pass (sublane direction), K taps.
    acc_h = g[0] * x[:, 0:Ho, :]
    for i in range(1, K):
        acc_h = acc_h + g[i] * x[:, i:i + Ho, :]
    # W pass (lane direction), K taps.
    acc = g[0] * acc_h[:, :, 0:Wo]
    for j in range(1, K):
        acc = acc + g[j] * acc_h[:, :, j:j + Wo]
    # Global spatial max == F.adaptive_max_pool2d(..., (1, 1)).
    m = jnp.max(acc, axis=2)                     # reduce lanes   -> (T, Ho)
    o_ref[...] = jnp.max(m, axis=1, keepdims=True)   # reduce sublanes -> (T, 1)


def conv_maxpool(assign, g1d, *, tile=8):
    """Depthwise Gaussian conv (VALID, same filter per part channel) followed
    by global spatial max. Returns part occurrences of shape (B, P)."""
    B, P, H, W = assign.shape
    K = int(g1d.shape[0])
    Ho, Wo = H - K + 1, W - K + 1
    BP = B * P
    n_blocks = pl.cdiv(BP, tile)
    N = n_blocks * tile

    x = assign.reshape(BP, H, W).astype(jnp.float32)
    if N != BP:
        # Zero-padded slabs produce 0 and are sliced off below.
        x = jnp.pad(x, ((0, N - BP), (0, 0), (0, 0)))

    kern = functools.partial(
        _conv_max_kernel, g=[float(v) for v in g1d], K=K, Ho=Ho, Wo=Wo)

    out = pl.pallas_call(
        kern,
        out_shape=jax.ShapeDtypeStruct((N, 1), jnp.float32),
        grid=(n_blocks,),
        in_specs=[pl.BlockSpec((tile, H, W), lambda i: (i, 0, 0))],
        out_specs=pl.BlockSpec((tile, 1), lambda i: (i, 0)),
        compiler_params=pltpu.CompilerParams(
            dimension_semantics=("parallel",),
            vmem_limit_bytes=32 * 1024 * 1024),
    )(x)
    return out[:BP, 0].reshape(B, P)


# -----------------------------------------------------------------------------
# Module equivalent
# -----------------------------------------------------------------------------
class NonlapLossPallas:
    def __init__(self, radius=2, std=0.2, alpha=1, beta=0.001, num_parts=5,
                 eps=1e-5):
        self.radius = radius
        self.std = std
        self.alpha = float(alpha)
        self.beta = float(beta)
        self.num_parts = num_parts
        self.eps = eps
        self.g1d = gaussian_kernel_1d_np(radius, std)   # separable factor
        self._prior_cache = {}                          # batch_size -> (B, 1)

    def _prior(self, batch_size):
        if batch_size not in self._prior_cache:
            gp = (np.arange(1.0, 2.0 * batch_size, 2.0, dtype=np.float32)
                  / (2.0 * batch_size))
            self._prior_cache[batch_size] = (
                beta_ppf_np(gp, self.alpha, self.beta)[:, None])
        return self._prior_cache[batch_size]

    def __call__(self, assign, mode='conv'):
        B = assign.shape[0]
        # Pallas: depthwise Gaussian conv + spatial max -> (B, num_parts).
        part_occ = conv_maxpool(assign, self.g1d)
        # Tail is tiny; XLA fuses it: ascending batch-dim sort, |log - log|, mean.
        emp = jnp.sort(part_occ, axis=0)
        prior = jnp.asarray(self._prior(B))              # cached, (B, 1)
        return jnp.mean(jnp.abs(jnp.log(emp + self.eps)
                                - jnp.log(prior + self.eps)))


# -----------------------------------------------------------------------------
# Pure-JAX reference (2D, non-separable — mirrors the PyTorch F.conv2d path)
# -----------------------------------------------------------------------------
def ref_loss(assign, module):
    radius, std = module.radius, module.std
    if radius > 0:
        size = 2 * radius + 1
        w = np.ones((size, size), np.float64)
        for i in range(-radius, radius + 1):
            for j in range(-radius, radius + 1):
                w[i + radius, j + radius] = np.exp(-(i * i + j * j)
                                                   / (2.0 * std * std))
        w = (w / w.sum()).astype(np.float32)
    else:
        w = np.ones((1, 1), np.float32)
    w = jnp.asarray(w)
    K = w.shape[0]
    B, P, H, W = assign.shape
    Ho, Wo = H - K + 1, W - K + 1
    acc = jnp.zeros((B, P, Ho, Wo), jnp.float32)
    for di in range(K):
        for dj in range(K):
            acc = acc + w[di, dj] * assign[:, :, di:di + Ho, dj:dj + Wo]
    occ = jnp.max(acc, axis=(2, 3))
    emp = jnp.sort(occ, axis=0)
    prior = jnp.asarray(module._prior(B))
    return jnp.mean(jnp.abs(jnp.log(emp + module.eps)
                            - jnp.log(prior + module.eps)))


if __name__ == "__main__":
    key = jax.random.PRNGKey(0)
    # assignment map: [batch=2, num_parts=5, H=16, W=16], values in (0, 1)
    assign = jax.random.uniform(key, (2, 5, 16, 16), dtype=jnp.float32)

    module = NonlapLossPallas(radius=2, std=0.2, alpha=1, beta=0.001,
                              num_parts=5, eps=1e-5)
    loss = jax.block_until_ready(module(assign))

    ref = jax.block_until_ready(ref_loss(assign.astype(jnp.float32), module))
    np.testing.assert_allclose(np.asarray(loss), np.asarray(ref),
                               rtol=1e-5, atol=1e-5)
    print("KERNEL_OK")
</pallas_src>

<mosaic_0001>
module attributes {stable_mosaic.version = 11 : i64} {
  func.func @_conv_max_kernel(%arg0: i32, %arg1: memref<8x16x16xf32, #tpu.memory_space<vmem>>, %arg2: memref<8x1xf32, #tpu.memory_space<vmem>>) attributes {dimension_semantics = [#tpu.dimension_semantics<parallel>], iteration_bounds = array<i64: 2>, scalar_prefetch = 0 : i64, scratch_operands = 0 : i64, tpu.core_type = #tpu.core_type<tc>, window_params = [{transform_indices = @transform_0, window_bounds = array<i64: 8, 16, 16>}, {transform_indices = @transform_1, window_bounds = array<i64: 8, 1>}]} {
    %c0 = arith.constant 0 : index
    %c0_0 = arith.constant 0 : index
    %c0_1 = arith.constant 0 : index
    %0 = vector.load %arg1[%c0, %c0_0, %c0_1] : memref<8x16x16xf32, #tpu.memory_space<vmem>>, vector<8x16x16xf32>
    %1 = vector.extract_strided_slice %0 {offsets = [0, 0, 0], sizes = [8, 12, 16], strides = [1, 1, 1]} : vector<8x16x16xf32> to vector<8x12x16xf32>
    %cst = arith.constant 1.9287355E-22 : f32
    %2 = vector.broadcast %cst : f32 to vector<8x12x16xf32>
    %3 = arith.mulf %2, %1 : vector<8x12x16xf32>
    %4 = vector.extract_strided_slice %0 {offsets = [0, 1, 0], sizes = [8, 12, 16], strides = [1, 1, 1]} : vector<8x16x16xf32> to vector<8x12x16xf32>
    %cst_2 = arith.constant 3.72662544E-6 : f32
    %5 = vector.broadcast %cst_2 : f32 to vector<8x12x16xf32>
    %6 = arith.mulf %5, %4 : vector<8x12x16xf32>
    %7 = arith.addf %3, %6 : vector<8x12x16xf32>
    %8 = vector.extract_strided_slice %0 {offsets = [0, 2, 0], sizes = [8, 12, 16], strides = [1, 1, 1]} : vector<8x16x16xf32> to vector<8x12x16xf32>
    %cst_3 = arith.constant 0.999992549 : f32
    %9 = vector.broadcast %cst_3 : f32 to vector<8x12x16xf32>
    %10 = arith.mulf %9, %8 : vector<8x12x16xf32>
    %11 = arith.addf %7, %10 : vector<8x12x16xf32>
    %12 = vector.extract_strided_slice %0 {offsets = [0, 3, 0], sizes = [8, 12, 16], strides = [1, 1, 1]} : vector<8x16x16xf32> to vector<8x12x16xf32>
    %cst_4 = arith.constant 3.72662544E-6 : f32
    %13 = vector.broadcast %cst_4 : f32 to vector<8x12x16xf32>
    %14 = arith.mulf %13, %12 : vector<8x12x16xf32>
    %15 = arith.addf %11, %14 : vector<8x12x16xf32>
    %16 = vector.extract_strided_slice %0 {offsets = [0, 4, 0], sizes = [8, 12, 16], strides = [1, 1, 1]} : vector<8x16x16xf32> to vector<8x12x16xf32>
    %cst_5 = arith.constant 1.9287355E-22 : f32
    %17 = vector.broadcast %cst_5 : f32 to vector<8x12x16xf32>
    %18 = arith.mulf %17, %16 : vector<8x12x16xf32>
    %19 = arith.addf %15, %18 : vector<8x12x16xf32>
    %20 = vector.extract_strided_slice %19 {offsets = [0, 0, 0], sizes = [8, 12, 12], strides = [1, 1, 1]} : vector<8x12x16xf32> to vector<8x12x12xf32>
    %cst_6 = arith.constant 1.9287355E-22 : f32
    %21 = vector.broadcast %cst_6 : f32 to vector<8x12x12xf32>
    %22 = arith.mulf %21, %20 : vector<8x12x12xf32>
    %23 = vector.extract_strided_slice %19 {offsets = [0, 0, 1], sizes = [8, 12, 12], strides = [1, 1, 1]} : vector<8x12x16xf32> to vector<8x12x12xf32>
    %cst_7 = arith.constant 3.72662544E-6 : f32
    %24 = vector.broadcast %cst_7 : f32 to vector<8x12x12xf32>
    %25 = arith.mulf %24, %23 : vector<8x12x12xf32>
    %26 = arith.addf %22, %25 : vector<8x12x12xf32>
    %27 = vector.extract_strided_slice %19 {offsets = [0, 0, 2], sizes = [8, 12, 12], strides = [1, 1, 1]} : vector<8x12x16xf32> to vector<8x12x12xf32>
    %cst_8 = arith.constant 0.999992549 : f32
    %28 = vector.broadcast %cst_8 : f32 to vector<8x12x12xf32>
    %29 = arith.mulf %28, %27 : vector<8x12x12xf32>
    %30 = arith.addf %26, %29 : vector<8x12x12xf32>
    %31 = vector.extract_strided_slice %19 {offsets = [0, 0, 3], sizes = [8, 12, 12], strides = [1, 1, 1]} : vector<8x12x16xf32> to vector<8x12x12xf32>
    %cst_9 = arith.constant 3.72662544E-6 : f32
    %32 = vector.broadcast %cst_9 : f32 to vector<8x12x12xf32>
    %33 = arith.mulf %32, %31 : vector<8x12x12xf32>
    %34 = arith.addf %30, %33 : vector<8x12x12xf32>
    %35 = vector.extract_strided_slice %19 {offsets = [0, 0, 4], sizes = [8, 12, 12], strides = [1, 1, 1]} : vector<8x12x16xf32> to vector<8x12x12xf32>
    %cst_10 = arith.constant 1.9287355E-22 : f32
    %36 = vector.broadcast %cst_10 : f32 to vector<8x12x12xf32>
    %37 = arith.mulf %36, %35 : vector<8x12x12xf32>
    %38 = arith.addf %34, %37 : vector<8x12x12xf32>
    %cst_11 = arith.constant dense<0xFF800000> : vector<8x12xf32>
    %39 = vector.multi_reduction <maximumf>, %38, %cst_11 [2] : vector<8x12x12xf32> to vector<8x12xf32>
    %cst_12 = arith.constant dense<0xFF800000> : vector<8xf32>
    %40 = vector.multi_reduction <maximumf>, %39, %cst_12 [1] : vector<8x12xf32> to vector<8xf32>
    %41 = vector.shape_cast %40 : vector<8xf32> to vector<8x1xf32>
    %c0_13 = arith.constant 0 : index
    %c0_14 = arith.constant 0 : index
    %42 = vector.load %arg2[%c0_13, %c0_14] : memref<8x1xf32, #tpu.memory_space<vmem>>, vector<8x1xf32>
    tpu.vector_store %arg2[%c0_13, %c0_14], %41 {strides = array<i32>} : memref<8x1xf32, #tpu.memory_space<vmem>>, vector<8x1xf32>,
    return
  }
  func.func @transform_0(%arg0: i32) -> (i32, i32, i32) {
    %c0_i32 = arith.constant 0 : i32
    %c0_i32_0 = arith.constant 0 : i32
    %c0_i32_1 = arith.constant 0 : i32
    return %arg0, %c0_i32, %c0_i32_0 : i32, i32, i32
  }
  func.func @transform_1(%arg0: i32) -> (i32, i32) {
    %c0_i32 = arith.constant 0 : i32
    %c0_i32_0 = arith.constant 0 : i32
    return %arg0, %c0_i32 : i32, i32
  }
}

</mosaic_0001>

<llo_original>
// kernel: tpu_custom_call.1
$region0: #{tpu_custom_call.1}
  #allocation0 [shape = 'u32[]', space=smem, size = 0x4, offset = 0x4, fixed_abs, tag = 'smem constant byte address 0x4 - core index']
  #allocation1 [shape = 'u32[72,128]{1,0:T(1,128)}', space=vmem, size = 0x9000, scoped, tag = 'internal scratch']
  %s0 = inlined_call_operand.hbm [shape: f32[16,16,16], index: 0, kind: input, shape index: {}]
  %s1 = inlined_call_operand.vmem [shape: f32[16,1], index: 1, kind: output, shape index: {}]
  %s2 = sld [smem:[#allocation0]]
  $region41: #{tpu_custom_call.1} parent=0
    _
  %s4 = ssub.s32 1, %s2
  %s5 = scalar_select 0, %s4, %s2
  $region1: #{tpu_custom_call.1} parent=0
    #allocation2 [shape = 'u8[131072]{0}', space=vmem, size = 0x20000, scoped, tag = 'input window, operand 0']
    #allocation3 [shape = 's32[2]{0}', space=sflag, size = 0x8, scoped, tag = 'scoped memory for tpu_custom_call.1']
    %6 = vsyncpa [#allocation3], 0
    %s7 = scalar_lea.sflag [#allocation3], 1
    %8 = vsyncpa %s7, 0
    loop: start=0, step=1, limit=4
    $region2: #{tpu_custom_call.1} parent=1 // loop_pre_header
      _
    $region3: #{tpu_custom_call.1} parent=1 // loop_header
      %s10 = sphi 0, %s14
      %p11 = scmp.ge.s32.totalorder %s10, 4
      %s20 = sphi 0, %s22
      %s23 = sphi 0, %s20
      %s24 = sphi 0, %s23
      %s40 = sphi 0, %s24
      %s46 = sphi 0, %s48
      %s49 = sphi 0, %s46
      %s50 = sphi 0, %s49
      %s66 = sphi 0, %s50
    $region4: #{tpu_custom_call.1} parent=1 // loop_header_branch
      %13 = sbr.rel (%p11) target = $region8
    $region5: #{tpu_custom_call.1} parent=1 // loop_body
      %s15 = ssub.s32 %s10, 1
      %s16 = ssub.s32 %s10, 2
      %s17 = sadd.s32 %s10, 1
      %s18 = ssub.s32 %s10, %s17
      %p19 = scmp.eq.s32.totalorder %s18, 0
      %s21 = sadd.s32 %s20, 1
      %s22 = scalar_select %p19, %s20, %s21
      %p25 = pneg %p19
      %p26 = scmp.eq.s32.totalorder %s10, 1
      %p27 = por %p25, %p26
      %p28 = scmp.ne.s32.totalorder %s20, %s23
      %p29 = scmp.eq.s32.totalorder %s10, 0
      %p30 = por %p28, %p29
      %p31 = scmp.ne.s32.totalorder %s20, %s23
      %p32 = scmp.eq.s32.totalorder %s15, 1
      %p33 = por %p31, %p32
      %p34 = scmp.ne.s32.totalorder %s23, %s24
      %p35 = scmp.eq.s32.totalorder %s15, 0
      %p36 = por %p34, %p35
      %p37 = scmp.ne.s32.totalorder %s23, %s24
      %p38 = scmp.eq.s32.totalorder %s16, 1
      %p39 = por %p37, %p38
      %p41 = scmp.ne.s32.totalorder %s24, %s40
      %p42 = scmp.eq.s32.totalorder %s16, 0
      %p43 = por %p41, %p42
      %s44 = ssub.s32 %s10, %s17
      %p45 = scmp.eq.s32.totalorder %s44, 0
      %s47 = sadd.s32 %s46, 1
      %s48 = scalar_select %p45, %s46, %s47
      %p51 = pneg %p45
      %p52 = scmp.eq.s32.totalorder %s10, 1
      %p53 = por %p51, %p52
      %p54 = scmp.ne.s32.totalorder %s46, %s49
      %p55 = scmp.eq.s32.totalorder %s10, 0
      %p56 = por %p54, %p55
      %p57 = scmp.ne.s32.totalorder %s46, %s49
      %p58 = scmp.eq.s32.totalorder %s15, 1
      %p59 = por %p57, %p58
      %p60 = scmp.ne.s32.totalorder %s49, %s50
      %p61 = scmp.eq.s32.totalorder %s15, 0
      %p62 = por %p60, %p61
      %p63 = scmp.ne.s32.totalorder %s49, %s50
      %p64 = scmp.eq.s32.totalorder %s16, 1
      %p65 = por %p63, %p64
      %p67 = scmp.ne.s32.totalorder %s50, %s66
      %p68 = scmp.eq.s32.totalorder %s16, 0
      %p69 = por %p67, %p68
      %p70 = scmp.le.s32.totalorder 1, %s10
      %p71 = scmp.lt.s32.totalorder %s10, 3
      %p72 = pnand %p70, %p71
      %p73 = pneg %p72
      // Predicated region
      $region9: #{tpu_custom_call.1} parent=5 // pred_check
        _
      $region10: #{tpu_custom_call.1} parent=5 // pred_check_branch
        %75 = sbr.rel (%p72) target = $region12
      $region11: #{tpu_custom_call.1} parent=5 // pred_region
        %s76 = ssub.s32 %s10, 1
      $region12: #{tpu_custom_call.1} parent=5 // pred_fallthru
        _
      %p77 = scmp.lt.s32.totalorder %s10, 2
      // Predicated region
      $region13: #{tpu_custom_call.1} parent=5 // pred_check
        %p78 = pneg %p77
      $region14: #{tpu_custom_call.1} parent=5 // pred_check_branch
        %80 = sbr.rel (%p78) target = $region16
      $region15: #{tpu_custom_call.1} parent=5 // pred_region
        // Predicated region
        $region17: #{tpu_custom_call.1} parent=15 // pred_check
          %p81 = pneg %p30
        $region18: #{tpu_custom_call.1} parent=15 // pred_check_branch
          %83 = sbr.rel (%p81) target = $region20
        $region19: #{tpu_custom_call.1} parent=15 // pred_region
          %s84 = sand.u32 %s20, 1
          %s85 = scalar_lea.sflag [#allocation3], %s84
          %s86 = sand.u32 %s20, 1
          %s87 = smul.addr %s86, 128
          %s88 = scalar_lea.vmem [#allocation2], %s87
          %s89 = smul.u32 8, %s10
          %91 = vsyncadd %s85, 0
          %s92 = smul.addr %s89, 2
          %s93 = smul.addr %s92, 8
          %s94 = scalar_lea.hbm %s0, %s93
          %s95 = sshll.u32 %s94, 4
          %s96 = int_to_ptr.hbm [resolvable:$true] %s95
          %s97 = sshll.u32 %s88, 4
          %s98 = int_to_ptr.vmem [resolvable:$true] %s97
          %103 = dma.hbm_to_vmem [thread:$0]  %s96, 2048, %s98, %s85, 128, 128, 8
        $region20: #{tpu_custom_call.1} parent=15 // pred_fallthru
          _
      $region16: #{tpu_custom_call.1} parent=5 // pred_fallthru
        _
      %p104 = scmp.le.s32.totalorder 1, %s10
      %p105 = scmp.lt.s32.totalorder %s10, 3
      %p106 = pnand %p104, %p105
      %p107 = pneg %p106
      // Predicated region
      $region21: #{tpu_custom_call.1} parent=5 // pred_check
        _
      $region22: #{tpu_custom_call.1} parent=5 // pred_check_branch
        %109 = sbr.rel (%p106) target = $region24
      $region23: #{tpu_custom_call.1} parent=5 // pred_region
        %s110 = ssub.s32 %s10, 1
        %s111 = sand.u32 %s23, 1
        %s112 = scalar_lea.sflag [#allocation3], %s111
        %s113 = sand.u32 %s23, 1
        %s114 = smul.addr %s113, 128
        %s115 = scalar_lea.vmem [#allocation2], %s114
        // Predicated region
        $region25: #{tpu_custom_call.1} parent=23 // pred_check
          %p116 = pneg %p36
        $region26: #{tpu_custom_call.1} parent=23 // pred_check_branch
          %118 = sbr.rel (%p116) target = $region28
        $region27: #{tpu_custom_call.1} parent=23 // pred_region
          %120 = dma.done %s112, 2048
        $region28: #{tpu_custom_call.1} parent=23 // pred_fallthru
          _
        %s121 = sand.u32 %s23, 1
        %s122 = scalar_lea.sflag [#allocation3], %s121
        %s123 = sand.u32 %s23, 1
        %s124 = smul.addr %s123, 128
        %s125 = scalar_lea.vmem [#allocation2], %s124
        %p126 = pneg %p36
        %p127 = pneg %p33
        %p128 = pneg %p62
        %p129 = pneg %p59
        %p130 = scmp.lt.s32.totalorder %s15, 1
        %s131 = scalar_select %p130, %s15, 1
        %s132 = smul.addr %s131, 8
        %s133 = scalar_lea.vmem %s1, %s132
        %s134 = smul.u32 8, %s15
        %p135 = scmp.lt.s32.totalorder %s15, 1
        %s136 = scalar_select %p135, %s15, 1
        %s137 = smul.addr %s136, 8
        %s138 = scalar_lea.vmem %s1, %s137
        %v139 = vld [vmem:[%s115] sm:$0xff]
        %v140 = vld [vmem:[%s115 + $0x8] sm:$0xff]
        %v141 = vld [vmem:[%s115 + $0x10] sm:$0xff]
        %v142 = vld [vmem:[%s115 + $0x18] sm:$0xff]
        %v143 = vld [vmem:[%s115 + $0x20] sm:$0xff]
        %v144 = vld [vmem:[%s115 + $0x28] sm:$0xff]
        %v145 = vld [vmem:[%s115 + $0x30] sm:$0xff]
        %v146 = vld [vmem:[%s115 + $0x38] sm:$0xff]
        %v147 = vld [vmem:[%s115 + $0x40] sm:$0xff]
        %v148 = vld [vmem:[%s115 + $0x48] sm:$0xff]
        %v149 = vld [vmem:[%s115 + $0x50] sm:$0xff]
        %v150 = vld [vmem:[%s115 + $0x58] sm:$0xff]
        %v151 = vld [vmem:[%s115 + $0x60] sm:$0xff]
        %v152 = vld [vmem:[%s115 + $0x68] sm:$0xff]
        %v153 = vld [vmem:[%s115 + $0x70] sm:$0xff]
        %v154 = vld [vmem:[%s115 + $0x78] sm:$0xff]
        %v155 = vmul.f32 %v139, 1.9287355e-22
        %v156 = vmul.f32 %v140, 1.9287355e-22
        %v157 = vmul.f32 %v141, 1.9287355e-22
        %v158 = vmul.f32 %v142, 1.9287355e-22
        %v159 = vmul.f32 %v143, 1.9287355e-22
        %v160 = vmul.f32 %v144, 1.9287355e-22
        %v161 = vmul.f32 %v145, 1.9287355e-22
        %v162 = vmul.f32 %v146, 1.9287355e-22
        %v163 = vmul.f32 %v147, 1.9287355e-22
        %v164 = vmul.f32 %v148, 1.9287355e-22
        %v165 = vmul.f32 %v149, 1.9287355e-22
        %v166 = vmul.f32 %v150, 1.9287355e-22
        %v167 = vmul.f32 %v151, 1.9287355e-22
        %v168 = vmul.f32 %v152, 1.9287355e-22
        %v169 = vmul.f32 %v153, 1.9287355e-22
        %v170 = vmul.f32 %v154, 1.9287355e-22
        %v171 = vmul.f32 %v139, 3.7266254e-06
        %v172 = vmul.f32 %v140, 3.7266254e-06
        %v173 = vmul.f32 %v141, 3.7266254e-06
        %v174 = vmul.f32 %v142, 3.7266254e-06
        %v175 = vmul.f32 %v143, 3.7266254e-06
        %v176 = vmul.f32 %v144, 3.7266254e-06
        %v177 = vmul.f32 %v145, 3.7266254e-06
        %v178 = vmul.f32 %v146, 3.7266254e-06
        %v179 = vmul.f32 %v147, 3.7266254e-06
        %v180 = vmul.f32 %v148, 3.7266254e-06
        %v181 = vmul.f32 %v149, 3.7266254e-06
        %v182 = vmul.f32 %v150, 3.7266254e-06
        %v183 = vmul.f32 %v151, 3.7266254e-06
        %v184 = vmul.f32 %v152, 3.7266254e-06
        %v185 = vmul.f32 %v153, 3.7266254e-06
        %v186 = vmul.f32 %v154, 3.7266254e-06
        %vm203 = vcmask 1046528
        %v204 = vrot.slane %v171, 1
        %v205 = vrot.slane %v172, 1
        %v206 = vsel %vm203, %v204, %v205
        %v207 = vrot.slane %v173, 1
        %v208 = vrot.slane %v174, 1
        %v209 = vsel %vm203, %v207, %v208
        %v210 = vrot.slane %v175, 1
        %v211 = vrot.slane %v176, 1
        %v212 = vsel %vm203, %v210, %v211
        %v213 = vrot.slane %v177, 1
        %v214 = vrot.slane %v178, 1
        %v215 = vsel %vm203, %v213, %v214
        %v216 = vrot.slane %v179, 1
        %v217 = vrot.slane %v180, 1
        %v218 = vsel %vm203, %v216, %v217
        %v219 = vrot.slane %v181, 1
        %v220 = vrot.slane %v182, 1
        %v221 = vsel %vm203, %v219, %v220
        %v222 = vrot.slane %v183, 1
        %v223 = vrot.slane %v184, 1
        %v224 = vsel %vm203, %v222, %v223
        %v225 = vrot.slane %v185, 1
        %v226 = vrot.slane %v186, 1
        %v227 = vsel %vm203, %v225, %v226
        %v244 = vadd.f32 %v155, %v206
        %v245 = vadd.f32 %v156, %v205
        %v246 = vadd.f32 %v157, %v209
        %v247 = vadd.f32 %v158, %v208
        %v248 = vadd.f32 %v159, %v212
        %v249 = vadd.f32 %v160, %v211
        %v250 = vadd.f32 %v161, %v215
        %v251 = vadd.f32 %v162, %v214
        %v252 = vadd.f32 %v163, %v218
        %v253 = vadd.f32 %v164, %v217
        %v254 = vadd.f32 %v165, %v221
        %v255 = vadd.f32 %v166, %v220
        %v256 = vadd.f32 %v167, %v224
        %v257 = vadd.f32 %v168, %v223
        %v258 = vadd.f32 %v169, %v227
        %v259 = vadd.f32 %v170, %v226
        %v260 = vmul.f32 %v139, 0.99999255
        %v261 = vmul.f32 %v140, 0.99999255
        %v262 = vmul.f32 %v141, 0.99999255
        %v263 = vmul.f32 %v142, 0.99999255
        %v264 = vmul.f32 %v143, 0.99999255
        %v265 = vmul.f32 %v144, 0.99999255
        %v266 = vmul.f32 %v145, 0.99999255
        %v267 = vmul.f32 %v146, 0.99999255
        %v268 = vmul.f32 %v147, 0.99999255
        %v269 = vmul.f32 %v148, 0.99999255
        %v270 = vmul.f32 %v149, 0.99999255
        %v271 = vmul.f32 %v150, 0.99999255
        %v272 = vmul.f32 %v151, 0.99999255
        %v273 = vmul.f32 %v152, 0.99999255
        %v274 = vmul.f32 %v153, 0.99999255
        %v275 = vmul.f32 %v154, 0.99999255
        %vm292 = vcmask 1045504
        %v293 = vrot.slane %v260, 2
        %v294 = vrot.slane %v261, 2
        %v295 = vsel %vm292, %v293, %v294
        %v296 = vrot.slane %v262, 2
        %v297 = vrot.slane %v263, 2
        %v298 = vsel %vm292, %v296, %v297
        %v299 = vrot.slane %v264, 2
        %v300 = vrot.slane %v265, 2
        %v301 = vsel %vm292, %v299, %v300
        %v302 = vrot.slane %v266, 2
        %v303 = vrot.slane %v267, 2
        %v304 = vsel %vm292, %v302, %v303
        %v305 = vrot.slane %v268, 2
        %v306 = vrot.slane %v269, 2
        %v307 = vsel %vm292, %v305, %v306
        %v308 = vrot.slane %v270, 2
        %v309 = vrot.slane %v271, 2
        %v310 = vsel %vm292, %v308, %v309
        %v311 = vrot.slane %v272, 2
        %v312 = vrot.slane %v273, 2
        %v313 = vsel %vm292, %v311, %v312
        %v314 = vrot.slane %v274, 2
        %v315 = vrot.slane %v275, 2
        %v316 = vsel %vm292, %v314, %v315
        %v333 = vadd.f32 %v244, %v295
        %v334 = vadd.f32 %v245, %v294
        %v335 = vadd.f32 %v246, %v298
        %v336 = vadd.f32 %v247, %v297
        %v337 = vadd.f32 %v248, %v301
        %v338 = vadd.f32 %v249, %v300
        %v339 = vadd.f32 %v250, %v304
        %v340 = vadd.f32 %v251, %v303
        %v341 = vadd.f32 %v252, %v307
        %v342 = vadd.f32 %v253, %v306
        %v343 = vadd.f32 %v254, %v310
        %v344 = vadd.f32 %v255, %v309
        %v345 = vadd.f32 %v256, %v313
        %v346 = vadd.f32 %v257, %v312
        %v347 = vadd.f32 %v258, %v316
        %v348 = vadd.f32 %v259, %v315
        %vm349 = vcmask 1044480
        %v350 = vrot.slane %v171, 3
        %v351 = vrot.slane %v172, 3
        %v352 = vsel %vm349, %v350, %v351
        %v353 = vrot.slane %v173, 3
        %v354 = vrot.slane %v174, 3
        %v355 = vsel %vm349, %v353, %v354
        %v356 = vrot.slane %v175, 3
        %v357 = vrot.slane %v176, 3
        %v358 = vsel %vm349, %v356, %v357
        %v359 = vrot.slane %v177, 3
        %v360 = vrot.slane %v178, 3
        %v361 = vsel %vm349, %v359, %v360
        %v362 = vrot.slane %v179, 3
        %v363 = vrot.slane %v180, 3
        %v364 = vsel %vm349, %v362, %v363
        %v365 = vrot.slane %v181, 3
        %v366 = vrot.slane %v182, 3
        %v367 = vsel %vm349, %v365, %v366
        %v368 = vrot.slane %v183, 3
        %v369 = vrot.slane %v184, 3
        %v370 = vsel %vm349, %v368, %v369
        %v371 = vrot.slane %v185, 3
        %v372 = vrot.slane %v186, 3
        %v373 = vsel %vm349, %v371, %v372
        %v390 = vadd.f32 %v333, %v352
        %v391 = vadd.f32 %v334, %v351
        %v392 = vadd.f32 %v335, %v355
        %v393 = vadd.f32 %v336, %v354
        %v394 = vadd.f32 %v337, %v358
        %v395 = vadd.f32 %v338, %v357
        %v396 = vadd.f32 %v339, %v361
        %v397 = vadd.f32 %v340, %v360
        %v398 = vadd.f32 %v341, %v364
        %v399 = vadd.f32 %v342, %v363
        %v400 = vadd.f32 %v343, %v367
        %v401 = vadd.f32 %v344, %v366
        %v402 = vadd.f32 %v345, %v370
        %v403 = vadd.f32 %v346, %v369
        %v404 = vadd.f32 %v347, %v373
        %v405 = vadd.f32 %v348, %v372
        %vm422 = vcmask 1043456
        %v423 = vrot.slane %v155, 4
        %v424 = vrot.slane %v156, 4
        %v425 = vsel %vm422, %v423, %v424
        %v426 = vrot.slane %v157, 4
        %v427 = vrot.slane %v158, 4
        %v428 = vsel %vm422, %v426, %v427
        %v429 = vrot.slane %v159, 4
        %v430 = vrot.slane %v160, 4
        %v431 = vsel %vm422, %v429, %v430
        %v432 = vrot.slane %v161, 4
        %v433 = vrot.slane %v162, 4
        %v434 = vsel %vm422, %v432, %v433
        %v435 = vrot.slane %v163, 4
        %v436 = vrot.slane %v164, 4
        %v437 = vsel %vm422, %v435, %v436
        %v438 = vrot.slane %v165, 4
        %v439 = vrot.slane %v166, 4
        %v440 = vsel %vm422, %v438, %v439
        %v441 = vrot.slane %v167, 4
        %v442 = vrot.slane %v168, 4
        %v443 = vsel %vm422, %v441, %v442
        %v444 = vrot.slane %v169, 4
        %v445 = vrot.slane %v170, 4
        %v446 = vsel %vm422, %v444, %v445
        %v463 = vadd.f32 %v390, %v425
        %v464 = vadd.f32 %v391, %v424
        %v465 = vadd.f32 %v392, %v428
        %v466 = vadd.f32 %v393, %v427
        %v467 = vadd.f32 %v394, %v431
        %v468 = vadd.f32 %v395, %v430
        %v469 = vadd.f32 %v396, %v434
        %v470 = vadd.f32 %v397, %v433
        %v471 = vadd.f32 %v398, %v437
        %v472 = vadd.f32 %v399, %v436
        %v473 = vadd.f32 %v400, %v440
        %v474 = vadd.f32 %v401, %v439
        %v475 = vadd.f32 %v402, %v443
        %v476 = vadd.f32 %v403, %v442
        %v477 = vadd.f32 %v404, %v446
        %v478 = vadd.f32 %v405, %v445
        %v479 = vmul.f32 %v463, 1.9287355e-22
        %v480 = vmul.f32 %v464, 1.9287355e-22
        %v481 = vmul.f32 %v465, 1.9287355e-22
        %v482 = vmul.f32 %v466, 1.9287355e-22
        %v483 = vmul.f32 %v467, 1.9287355e-22
        %v484 = vmul.f32 %v468, 1.9287355e-22
        %v485 = vmul.f32 %v469, 1.9287355e-22
        %v486 = vmul.f32 %v470, 1.9287355e-22
        %v487 = vmul.f32 %v471, 1.9287355e-22
        %v488 = vmul.f32 %v472, 1.9287355e-22
        %v489 = vmul.f32 %v473, 1.9287355e-22
        %v490 = vmul.f32 %v474, 1.9287355e-22
        %v491 = vmul.f32 %v475, 1.9287355e-22
        %v492 = vmul.f32 %v476, 1.9287355e-22
        %v493 = vmul.f32 %v477, 1.9287355e-22
        %v494 = vmul.f32 %v478, 1.9287355e-22
        %v495 = vmul.f32 %v463, 3.7266254e-06
        %v496 = vmul.f32 %v464, 3.7266254e-06
        %v497 = vmul.f32 %v465, 3.7266254e-06
        %v498 = vmul.f32 %v466, 3.7266254e-06
        %v499 = vmul.f32 %v467, 3.7266254e-06
        %v500 = vmul.f32 %v468, 3.7266254e-06
        %v501 = vmul.f32 %v469, 3.7266254e-06
        %v502 = vmul.f32 %v470, 3.7266254e-06
        %v503 = vmul.f32 %v471, 3.7266254e-06
        %v504 = vmul.f32 %v472, 3.7266254e-06
        %v505 = vmul.f32 %v473, 3.7266254e-06
        %v506 = vmul.f32 %v474, 3.7266254e-06
        %v507 = vmul.f32 %v475, 3.7266254e-06
        %v508 = vmul.f32 %v476, 3.7266254e-06
        %v509 = vmul.f32 %v477, 3.7266254e-06
        %v510 = vmul.f32 %v478, 3.7266254e-06
        %527 = vrot.lane.b32.xlu0 %v495, 127
        %v528 = vpop.permute.xlu0 %527
        %529 = vrot.lane.b32.xlu0 %v496, 127
        %v530 = vpop.permute.xlu0 %529
        %531 = vrot.lane.b32.xlu0 %v497, 127
        %v532 = vpop.permute.xlu0 %531
        %533 = vrot.lane.b32.xlu0 %v498, 127
        %v534 = vpop.permute.xlu0 %533
        %535 = vrot.lane.b32.xlu0 %v499, 127
        %v536 = vpop.permute.xlu0 %535
        %537 = vrot.lane.b32.xlu0 %v500, 127
        %v538 = vpop.permute.xlu0 %537
        %539 = vrot.lane.b32.xlu0 %v501, 127
        %v540 = vpop.permute.xlu0 %539
        %541 = vrot.lane.b32.xlu0 %v502, 127
        %v542 = vpop.permute.xlu0 %541
        %543 = vrot.lane.b32.xlu0 %v503, 127
        %v544 = vpop.permute.xlu0 %543
        %545 = vrot.lane.b32.xlu0 %v504, 127
        %v546 = vpop.permute.xlu0 %545
        %547 = vrot.lane.b32.xlu0 %v505, 127
        %v548 = vpop.permute.xlu0 %547
        %549 = vrot.lane.b32.xlu0 %v506, 127
        %v550 = vpop.permute.xlu0 %549
        %551 = vrot.lane.b32.xlu0 %v507, 127
        %v552 = vpop.permute.xlu0 %551
        %553 = vrot.lane.b32.xlu0 %v508, 127
        %v554 = vpop.permute.xlu0 %553
        %555 = vrot.lane.b32.xlu0 %v509, 127
        %v556 = vpop.permute.xlu0 %555
        %557 = vrot.lane.b32.xlu0 %v510, 127
        %v558 = vpop.permute.xlu0 %557
        %v575 = vadd.f32 %v479, %v528
        %v576 = vadd.f32 %v480, %v530
        %v577 = vadd.f32 %v481, %v532
        %v578 = vadd.f32 %v482, %v534
        %v579 = vadd.f32 %v483, %v536
        %v580 = vadd.f32 %v484, %v538
        %v581 = vadd.f32 %v485, %v540
        %v582 = vadd.f32 %v486, %v542
        %v583 = vadd.f32 %v487, %v544
        %v584 = vadd.f32 %v488, %v546
        %v585 = vadd.f32 %v489, %v548
        %v586 = vadd.f32 %v490, %v550
        %v587 = vadd.f32 %v491, %v552
        %v588 = vadd.f32 %v492, %v554
        %v589 = vadd.f32 %v493, %v556
        %v590 = vadd.f32 %v494, %v558
        %v591 = vmul.f32 %v463, 0.99999255
        %v592 = vmul.f32 %v464, 0.99999255
        %v593 = vmul.f32 %v465, 0.99999255
        %v594 = vmul.f32 %v466, 0.99999255
        %v595 = vmul.f32 %v467, 0.99999255
        %v596 = vmul.f32 %v468, 0.99999255
        %v597 = vmul.f32 %v469, 0.99999255
        %v598 = vmul.f32 %v470, 0.99999255
        %v599 = vmul.f32 %v471, 0.99999255
        %v600 = vmul.f32 %v472, 0.99999255
        %v601 = vmul.f32 %v473, 0.99999255
        %v602 = vmul.f32 %v474, 0.99999255
        %v603 = vmul.f32 %v475, 0.99999255
        %v604 = vmul.f32 %v476, 0.99999255
        %v605 = vmul.f32 %v477, 0.99999255
        %v606 = vmul.f32 %v478, 0.99999255
        %623 = vrot.lane.b32.xlu0 %v591, 126
        %v624 = vpop.permute.xlu0 %623
        %625 = vrot.lane.b32.xlu0 %v592, 126
        %v626 = vpop.permute.xlu0 %625
        %627 = vrot.lane.b32.xlu0 %v593, 126
        %v628 = vpop.permute.xlu0 %627
        %629 = vrot.lane.b32.xlu0 %v594, 126
        %v630 = vpop.permute.xlu0 %629
        %631 = vrot.lane.b32.xlu0 %v595, 126
        %v632 = vpop.permute.xlu0 %631
        %633 = vrot.lane.b32.xlu0 %v596, 126
        %v634 = vpop.permute.xlu0 %633
        %635 = vrot.lane.b32.xlu0 %v597, 126
        %v636 = vpop.permute.xlu0 %635
        %637 = vrot.lane.b32.xlu0 %v598, 126
        %v638 = vpop.permute.xlu0 %637
        %639 = vrot.lane.b32.xlu0 %v599, 126
        %v640 = vpop.permute.xlu0 %639
        %641 = vrot.lane.b32.xlu0 %v600, 126
        %v642 = vpop.permute.xlu0 %641
        %643 = vrot.lane.b32.xlu0 %v601, 126
        %v644 = vpop.permute.xlu0 %643
        %645 = vrot.lane.b32.xlu0 %v602, 126
        %v646 = vpop.permute.xlu0 %645
        %647 = vrot.lane.b32.xlu0 %v603, 126
        %v648 = vpop.permute.xlu0 %647
        %649 = vrot.lane.b32.xlu0 %v604, 126
        %v650 = vpop.permute.xlu0 %649
        %651 = vrot.lane.b32.xlu0 %v605, 126
        %v652 = vpop.permute.xlu0 %651
        %653 = vrot.lane.b32.xlu0 %v606, 126
        %v654 = vpop.permute.xlu0 %653
        %v671 = vadd.f32 %v575, %v624
        %v672 = vadd.f32 %v576, %v626
        %v673 = vadd.f32 %v577, %v628
        %v674 = vadd.f32 %v578, %v630
        %v675 = vadd.f32 %v579, %v632
        %v676 = vadd.f32 %v580, %v634
        %v677 = vadd.f32 %v581, %v636
        %v678 = vadd.f32 %v582, %v638
        %v679 = vadd.f32 %v583, %v640
        %v680 = vadd.f32 %v584, %v642
        %v681 = vadd.f32 %v585, %v644
        %v682 = vadd.f32 %v586, %v646
        %v683 = vadd.f32 %v587, %v648
        %v684 = vadd.f32 %v588, %v650
        %v685 = vadd.f32 %v589, %v652
        %v686 = vadd.f32 %v590, %v654
        %687 = vrot.lane.b32.xlu0 %v495, 125
        %v688 = vpop.permute.xlu0 %687
        %689 = vrot.lane.b32.xlu0 %v496, 125
        %v690 = vpop.permute.xlu0 %689
        %691 = vrot.lane.b32.xlu0 %v497, 125
        %v692 = vpop.permute.xlu0 %691
        %693 = vrot.lane.b32.xlu0 %v498, 125
        %v694 = vpop.permute.xlu0 %693
        %695 = vrot.lane.b32.xlu0 %v499, 125
        %v696 = vpop.permute.xlu0 %695
        %697 = vrot.lane.b32.xlu0 %v500, 125
        %v698 = vpop.permute.xlu0 %697
        %699 = vrot.lane.b32.xlu0 %v501, 125
        %v700 = vpop.permute.xlu0 %699
        %701 = vrot.lane.b32.xlu0 %v502, 125
        %v702 = vpop.permute.xlu0 %701
        %703 = vrot.lane.b32.xlu0 %v503, 125
        %v704 = vpop.permute.xlu0 %703
        %705 = vrot.lane.b32.xlu0 %v504, 125
        %v706 = vpop.permute.xlu0 %705
        %707 = vrot.lane.b32.xlu0 %v505, 125
        %v708 = vpop.permute.xlu0 %707
        %709 = vrot.lane.b32.xlu0 %v506, 125
        %v710 = vpop.permute.xlu0 %709
        %711 = vrot.lane.b32.xlu0 %v507, 125
        %v712 = vpop.permute.xlu0 %711
        %713 = vrot.lane.b32.xlu0 %v508, 125
        %v714 = vpop.permute.xlu0 %713
        %715 = vrot.lane.b32.xlu0 %v509, 125
        %v716 = vpop.permute.xlu0 %715
        %717 = vrot.lane.b32.xlu0 %v510, 125
        %v718 = vpop.permute.xlu0 %717
        %v735 = vadd.f32 %v671, %v688
        %v736 = vadd.f32 %v672, %v690
        %v737 = vadd.f32 %v673, %v692
        %v738 = vadd.f32 %v674, %v694
        %v739 = vadd.f32 %v675, %v696
        %v740 = vadd.f32 %v676, %v698
        %v741 = vadd.f32 %v677, %v700
        %v742 = vadd.f32 %v678, %v702
        %v743 = vadd.f32 %v679, %v704
        %v744 = vadd.f32 %v680, %v706
        %v745 = vadd.f32 %v681, %v708
        %v746 = vadd.f32 %v682, %v710
        %v747 = vadd.f32 %v683, %v712
        %v748 = vadd.f32 %v684, %v714
        %v749 = vadd.f32 %v685, %v716
        %v750 = vadd.f32 %v686, %v718
        %767 = vrot.lane.b32.xlu0 %v479, 124
        %v768 = vpop.permute.xlu0 %767
        %769 = vrot.lane.b32.xlu0 %v480, 124
        %v770 = vpop.permute.xlu0 %769
        %771 = vrot.lane.b32.xlu0 %v481, 124
        %v772 = vpop.permute.xlu0 %771
        %773 = vrot.lane.b32.xlu0 %v482, 124
        %v774 = vpop.permute.xlu0 %773
        %775 = vrot.lane.b32.xlu0 %v483, 124
        %v776 = vpop.permute.xlu0 %775
        %777 = vrot.lane.b32.xlu0 %v484, 124
        %v778 = vpop.permute.xlu0 %777
        %779 = vrot.lane.b32.xlu0 %v485, 124
        %v780 = vpop.permute.xlu0 %779
        %781 = vrot.lane.b32.xlu0 %v486, 124
        %v782 = vpop.permute.xlu0 %781
        %783 = vrot.lane.b32.xlu0 %v487, 124
        %v784 = vpop.permute.xlu0 %783
        %785 = vrot.lane.b32.xlu0 %v488, 124
        %v786 = vpop.permute.xlu0 %785
        %787 = vrot.lane.b32.xlu0 %v489, 124
        %v788 = vpop.permute.xlu0 %787
        %789 = vrot.lane.b32.xlu0 %v490, 124
        %v790 = vpop.permute.xlu0 %789
        %791 = vrot.lane.b32.xlu0 %v491, 124
        %v792 = vpop.permute.xlu0 %791
        %793 = vrot.lane.b32.xlu0 %v492, 124
        %v794 = vpop.permute.xlu0 %793
        %795 = vrot.lane.b32.xlu0 %v493, 124
        %v796 = vpop.permute.xlu0 %795
        %797 = vrot.lane.b32.xlu0 %v494, 124
        %v798 = vpop.permute.xlu0 %797
        %v815 = vadd.f32 %v735, %v768
        %v816 = vadd.f32 %v736, %v770
        %v817 = vadd.f32 %v737, %v772
        %v818 = vadd.f32 %v738, %v774
        %v819 = vadd.f32 %v739, %v776
        %v820 = vadd.f32 %v740, %v778
        %v821 = vadd.f32 %v741, %v780
        %v822 = vadd.f32 %v742, %v782
        %v823 = vadd.f32 %v743, %v784
        %v824 = vadd.f32 %v744, %v786
        %v825 = vadd.f32 %v745, %v788
        %v826 = vadd.f32 %v746, %v790
        %v827 = vadd.f32 %v747, %v792
        %v828 = vadd.f32 %v748, %v794
        %v829 = vadd.f32 %v749, %v796
        %v830 = vadd.f32 %v750, %v798
        %vm831 = vcmask 97280
        %v832 = vsel %vm831, %v815, -inf
        %833 = vmax.xlane.f32.xlu0 %v832
        %v834 = vpop.xlane.xlu0 %833
        %vm835 = vcmask 93184
        %v836 = vsel %vm835, %v816, -inf
        %837 = vmax.xlane.f32.xlu0 %v836
        %v838 = vpop.xlane.xlu0 %837
        %v839 = vsel %vm831, %v817, -inf
        %840 = vmax.xlane.f32.xlu0 %v839
        %v841 = vpop.xlane.xlu0 %840
        %v842 = vsel %vm835, %v818, -inf
        %843 = vmax.xlane.f32.xlu0 %v842
        %v844 = vpop.xlane.xlu0 %843
        %v845 = vsel %vm831, %v819, -inf
        %846 = vmax.xlane.f32.xlu0 %v845
        %v847 = vpop.xlane.xlu0 %846
        %v848 = vsel %vm835, %v820, -inf
        %849 = vmax.xlane.f32.xlu0 %v848
        %v850 = vpop.xlane.xlu0 %849
        %v851 = vsel %vm831, %v821, -inf
        %852 = vmax.xlane.f32.xlu0 %v851
        %v853 = vpop.xlane.xlu0 %852
        %v854 = vsel %vm835, %v822, -inf
        %855 = vmax.xlane.f32.xlu0 %v854
        %v856 = vpop.xlane.xlu0 %855
        %v857 = vsel %vm831, %v823, -inf
        %858 = vmax.xlane.f32.xlu0 %v857
        %v859 = vpop.xlane.xlu0 %858
        %v860 = vsel %vm835, %v824, -inf
        %861 = vmax.xlane.f32.xlu0 %v860
        %v862 = vpop.xlane.xlu0 %861
        %v863 = vsel %vm831, %v825, -inf
        %864 = vmax.xlane.f32.xlu0 %v863
        %v865 = vpop.xlane.xlu0 %864
        %v866 = vsel %vm835, %v826, -inf
        %867 = vmax.xlane.f32.xlu0 %v866
        %v868 = vpop.xlane.xlu0 %867
        %v869 = vsel %vm831, %v827, -inf
        %870 = vmax.xlane.f32.xlu0 %v869
        %v871 = vpop.xlane.xlu0 %870
        %v872 = vsel %vm835, %v828, -inf
        %873 = vmax.xlane.f32.xlu0 %v872
        %v874 = vpop.xlane.xlu0 %873
        %v875 = vsel %vm831, %v829, -inf
        %876 = vmax.xlane.f32.xlu0 %v875
        %v877 = vpop.xlane.xlu0 %876
        %v878 = vsel %vm835, %v830, -inf
        %879 = vmax.xlane.f32.xlu0 %v878
        %v880 = vpop.xlane.xlu0 %879
        %v897 = vlaneseq
        %v898 = vand.u32 %v897, 127
        %v899 = vperm.slane %v834, %v898
        %v900 = vadd.s32 %v898, 4294967288
        %v901 = vperm.slane %v838, %v900
        %vm902 = vcmask 130112
        %v903 = vsel %vm902, %v901, %v899
        %v904 = vperm.slane %v841, %v898
        %v905 = vperm.slane %v844, %v900
        %v906 = vsel %vm902, %v905, %v904
        %v907 = vperm.slane %v847, %v898
        %v908 = vperm.slane %v850, %v900
        %v909 = vsel %vm902, %v908, %v907
        %v910 = vperm.slane %v853, %v898
        %v911 = vperm.slane %v856, %v900
        %v912 = vsel %vm902, %v911, %v910
        %v913 = vperm.slane %v859, %v898
        %v914 = vperm.slane %v862, %v900
        %v915 = vsel %vm902, %v914, %v913
        %v916 = vperm.slane %v865, %v898
        %v917 = vperm.slane %v868, %v900
        %v918 = vsel %vm902, %v917, %v916
        %v919 = vperm.slane %v871, %v898
        %v920 = vperm.slane %v874, %v900
        %v921 = vsel %vm902, %v920, %v919
        %v922 = vperm.slane %v877, %v898
        %v923 = vperm.slane %v880, %v900
        %v924 = vsel %vm902, %v923, %v922
        %vm925 = vcmask 1041409
        %v926 = vsel %vm925, %v906, %v903
        %vm927 = vcmask 1042434
        %v928 = vsel %vm927, %v909, %v926
        %vm929 = vcmask 1043459
        %v930 = vsel %vm929, %v912, %v928
        %vm931 = vcmask 1044484
        %v932 = vsel %vm931, %v915, %v930
        %vm933 = vcmask 1045509
        %v934 = vsel %vm933, %v918, %v932
        %vm935 = vcmask 1046534
        %v936 = vsel %vm935, %v921, %v934
        %vm937 = vcmask 1047559
        %v938 = vsel %vm937, %v924, %v936
        %v940 = vsel %vm831, %v938, -inf
        %941 = vmax.xlane.f32.xlu0 %v940
        %v942 = vpop.xlane.xlu0 %941
        %vm943 = vcmask 7168
        %944 = vst.msk [vmem:[%s138] sm:$0xff] %vm943, %v942
        %p945 = scmp.lt.s32.totalorder %s15, 1
        %s946 = scalar_select %p945, %s15, 1
        %s947 = smul.addr %s946, 8
        %s948 = scalar_lea.vmem %s1, %s947
        // Predicated region
        $region29: #{tpu_custom_call.1} parent=23 // pred_check
          %p949 = pneg %p59
        $region30: #{tpu_custom_call.1} parent=23 // pred_check_branch
          %951 = sbr.rel (%p949) target = $region32
        $region31: #{tpu_custom_call.1} parent=23 // pred_region
          _
        $region32: #{tpu_custom_call.1} parent=23 // pred_fallthru
          _
      $region24: #{tpu_custom_call.1} parent=5 // pred_fallthru
        _
      %p952 = scmp.le.s32.totalorder 2, %s10
      // Predicated region
      $region33: #{tpu_custom_call.1} parent=5 // pred_check
        %p953 = pneg %p952
      $region34: #{tpu_custom_call.1} parent=5 // pred_check_branch
        %955 = sbr.rel (%p953) target = $region36
      $region35: #{tpu_custom_call.1} parent=5 // pred_region
        %s956 = ssub.s32 %s10, 2
        // Predicated region
        $region37: #{tpu_custom_call.1} parent=35 // pred_check
          %p957 = pneg %p65
        $region38: #{tpu_custom_call.1} parent=35 // pred_check_branch
          %959 = sbr.rel (%p957) target = $region40
        $region39: #{tpu_custom_call.1} parent=35 // pred_region
          %p960 = scmp.lt.s32.totalorder %s16, 1
          %s961 = scalar_select %p960, %s16, 1
          %s962 = smul.addr %s961, 8
          %s963 = scalar_lea.vmem %s1, %s962
        $region40: #{tpu_custom_call.1} parent=35 // pred_fallthru
          _
      $region36: #{tpu_custom_call.1} parent=5 // pred_fallthru
        _
    $region6: #{tpu_custom_call.1} parent=1 // loop_footer
      %s14 = sadd.s32 1, %s10
    $region7: #{tpu_custom_call.1} parent=1 // loop_footer_branch
      %9 = sbr.rel target = $region3
    $region8: #{tpu_custom_call.1} parent=1 // loop_exit
      _
    %964 = vsyncpa [#allocation3], 1
    %s965 = scalar_lea.sflag [#allocation3], 1
    %966 = vsyncpa %s965, 1

</llo_original>
